<compile_context>
chip_gen: v6e
topology: v6e:2x2x1
jax: 0.10.0
libtpu: 0.0.40
codegen_flags: <defaults>
</compile_context>

<pallas_src>
import jax
import jax.numpy as jnp
from jax import lax
from jax.experimental import pallas as pl
from jax.experimental.pallas import tpu as pltpu

BN_EPS = 1e-5


def _round_up(x, m):
    return ((x + m - 1) // m) * m


def _neumf_kernel(uidx_ref, iidx_ref, au_ref, ai_ref, b1_ref,
                  w2t_ref, b2_ref, wo_ref, bo_ref, out_ref):
    nu = au_ref.shape[1]
    ni = ai_ref.shape[1]
    tb = uidx_ref.shape[1]

    # Fused embedding lookup: one-hot(idx) selection done on the MXU.
    # onehot[n, j] = (n == idx[j]);  (A @ onehot)[:, j] = A[:, idx[j]].
    oh_u = (lax.broadcasted_iota(jnp.int32, (nu, tb), 0)
            == uidx_ref[...]).astype(jnp.bfloat16)
    oh_i = (lax.broadcasted_iota(jnp.int32, (ni, tb), 0)
            == iidx_ref[...]).astype(jnp.bfloat16)

    # Layer 1 (tables pre-folded through BN-folded W1) + ReLU.
    h = (jnp.dot(au_ref[...], oh_u, preferred_element_type=jnp.float32)
         + jnp.dot(ai_ref[...], oh_i, preferred_element_type=jnp.float32)
         + b1_ref[...])
    h = jnp.maximum(h, 0.0)
    # Dropout(p=0.2) is identity at inference time.

    # Layer 2 (BN folded into w2/b2) + ReLU.
    h = jnp.dot(w2t_ref[...], h.astype(jnp.bfloat16),
                preferred_element_type=jnp.float32) + b2_ref[...]
    h = jnp.maximum(h, 0.0)

    # Affine output (out_features=1): VPU multiply + sublane reduction gives
    # a lane-dense (1, TB) logits row directly; then sigmoid.
    logits = jnp.sum(h * wo_ref[...], axis=0, keepdims=True) + bo_ref[0, 0]
    out_ref[...] = jax.nn.sigmoid(logits)


def prepare_params(params):
    """One-time constant folding:
       * eval-mode BatchNorm folded into the linear layers,
       * title/content item tables merged (same indices),
       * each embedding table folded through the first linear layer
         (emb @ W1 == onehot @ (table @ W1)),
       * transposed + bf16 cast of the MXU operands (batch on lanes)."""
    s1 = params["g1"] * jax.lax.rsqrt(params["var1"] + BN_EPS)      # (1, h1)
    w1 = params["w1"] * s1                                          # col scale
    b1 = (params["b1"] - params["mean1"]) * s1 + params["beta1"]
    s2 = params["g2"] * jax.lax.rsqrt(params["var2"] + BN_EPS)      # (1, h2)
    w2 = params["w2"] * s2
    b2 = (params["b2"] - params["mean2"]) * s2 + params["beta2"]

    ld = params["embedding_user"].shape[1]
    item_table = jnp.concatenate(
        [params["item_title"], params["item_content"]], axis=1)    # (NI, td+cd)

    a_user = (params["embedding_user"] @ w1[:ld]).T                 # (h1, NU) f32
    a_item = (item_table @ w1[ld:]).T                               # (h1, NI) f32
    return {
        "a_user": a_user.astype(jnp.bfloat16),                      # (h1, NU)
        "a_item": a_item.astype(jnp.bfloat16),                      # (h1, NI)
        "b1t": b1.T.astype(jnp.float32),                            # (h1, 1)
        "w2t": w2.T.astype(jnp.bfloat16),                           # (h2, h1)
        "b2t": b2.T.astype(jnp.float32),                            # (h2, 1)
        "wo_col": params["wo"].astype(jnp.float32),                 # (h2, 1)
        "bo": params["bo"].astype(jnp.float32),                     # (1, 1) -> SMEM
    }


def neumf_forward(user_indices, item_indices, fused, *, tb=2048):
    """EmbeddingNeuMF forward: a single batch-tiled Pallas kernel with the
    embedding gather fused in and all weights/tables VMEM-resident."""
    B = user_indices.shape[0]
    h1, nu = fused["a_user"].shape
    h2 = fused["w2t"].shape[0]
    ni = fused["a_item"].shape[1]

    # Batch lives on the lane axis: tile is a multiple of 128, at most `tb`,
    # and capped so grid_n >= 2 when B allows it (v7x: 2 TensorCores).
    TB = min(tb, max(128, _round_up(pl.cdiv(B, 2), 128)))
    B_pad = _round_up(B, TB)
    grid_n = B_pad // TB

    ui = user_indices.astype(jnp.int32)
    ii = item_indices.astype(jnp.int32)
    if B_pad != B:  # only the tiny int32 index vectors get padded
        ui = jnp.pad(ui, (0, B_pad - B))
        ii = jnp.pad(ii, (0, B_pad - B))
    ui = ui.reshape(grid_n, TB)
    ii = ii.reshape(grid_n, TB)

    idx_spec = pl.BlockSpec((1, TB), lambda i: (i, 0))

    def const_spec(arr):
        # Same block every grid step -> DMA'd once, stays VMEM-resident.
        return pl.BlockSpec(arr.shape, lambda i: (0, 0))

    const_names = ("a_user", "a_item", "b1t", "w2t", "b2t", "wo_col")
    const_bytes = int(sum(fused[k].size * fused[k].dtype.itemsize
                          for k in const_names))
    # Per-step VMEM: index blocks + output block + one-hot temps + activations
    # (double-buffered headroom); cap at v7x's 64 MiB physical VMEM per core.
    per_step = TB * (3 * 4 + (nu + ni) * 2 + (h1 + h2) * 4)
    vmem_limit = int(min(64 * 1024 * 1024,
                         max(32 * 1024 * 1024, const_bytes + 4 * per_step)))

    cost = pl.CostEstimate(
        flops=2 * B_pad * ((nu + ni) * h1 + h1 * h2 + h2),
        transcendentals=B_pad,
        bytes_accessed=const_bytes + 3 * B_pad * 4)

    out = pl.pallas_call(
        _neumf_kernel,
        out_shape=jax.ShapeDtypeStruct((grid_n, TB), jnp.float32),
        grid_spec=pltpu.PrefetchScalarGridSpec(
            num_scalar_prefetch=0,
            grid=(grid_n,),
            in_specs=[
                idx_spec, idx_spec,
                const_spec(fused["a_user"]), const_spec(fused["a_item"]),
                const_spec(fused["b1t"]), const_spec(fused["w2t"]),
                const_spec(fused["b2t"]), const_spec(fused["wo_col"]),
                pl.BlockSpec(memory_space=pltpu.MemorySpace.SMEM),   # bo scalar
            ],
            out_specs=pl.BlockSpec((1, TB), lambda i: (i, 0)),
        ),
        compiler_params=pltpu.CompilerParams(
            dimension_semantics=("parallel",),
            vmem_limit_bytes=vmem_limit),
        cost_estimate=cost,
    )(ui, ii,
      fused["a_user"], fused["a_item"], fused["b1t"],
      fused["w2t"], fused["b2t"], fused["wo_col"], fused["bo"])

    return out.reshape(B_pad, 1)[:B]


def init_params(key, num_users, num_items, latent_dim, title_dim, content_dim,
                layers):
    """Deterministic synthetic parameter init (no checkpoint loading)."""
    assert layers[0] == latent_dim + title_dim + content_dim
    ks = jax.random.split(key, 16)
    p = {}
    p["embedding_user"] = jax.random.normal(
        ks[0], (num_users, latent_dim), jnp.float32) * 0.1
    p["item_title"] = jax.random.normal(
        ks[1], (num_items, title_dim), jnp.float32) * 0.1
    p["item_content"] = jax.random.normal(
        ks[2], (num_items, content_dim), jnp.float32) * 0.1

    d0, h1, h2 = layers
    # fc layer 1
    p["w1"] = jax.random.normal(ks[3], (d0, h1), jnp.float32) * (1.0 / d0) ** 0.5
    p["b1"] = jax.random.normal(ks[4], (1, h1), jnp.float32) * 0.01
    p["g1"] = 1.0 + 0.1 * jax.random.normal(ks[5], (1, h1), jnp.float32)
    p["beta1"] = 0.1 * jax.random.normal(ks[6], (1, h1), jnp.float32)
    p["mean1"] = 0.1 * jax.random.normal(ks[7], (1, h1), jnp.float32)
    p["var1"] = 1.0 + 0.1 * jax.random.uniform(ks[8], (1, h1), jnp.float32)
    # fc layer 2
    p["w2"] = jax.random.normal(ks[9], (h1, h2), jnp.float32) * (1.0 / h1) ** 0.5
    p["b2"] = jax.random.normal(ks[10], (1, h2), jnp.float32) * 0.01
    p["g2"] = 1.0 + 0.1 * jax.random.normal(ks[11], (1, h2), jnp.float32)
    p["beta2"] = 0.1 * jax.random.normal(ks[12], (1, h2), jnp.float32)
    p["mean2"] = 0.1 * jax.random.normal(ks[13], (1, h2), jnp.float32)
    p["var2"] = 1.0 + 0.1 * jax.random.uniform(ks[14], (1, h2), jnp.float32)
    # affine output
    p["wo"] = jax.random.normal(ks[15], (h2, 1), jnp.float32) * (1.0 / h2) ** 0.5
    p["bo"] = jnp.zeros((1, 1), jnp.float32)
    return p


if __name__ == "__main__":
    # Small synthetic config consistent with the module's __init__:
    #   latent_dim + title_dim + content_dim == layers[0]
    num_users, num_items = 32, 40
    latent_dim, title_dim, content_dim = 16, 24, 24
    layers = [64, 32, 16]
    batch = 8

    key = jax.random.PRNGKey(0)
    k_params, k_u, k_i = jax.random.split(key, 3)
    params = init_params(k_params, num_users, num_items, latent_dim,
                         title_dim, content_dim, layers)
    fused = prepare_params(params)

    user_indices = jax.random.randint(k_u, (batch,), 0, num_users, jnp.int32)
    item_indices = jax.random.randint(k_i, (batch,), 0, num_items, jnp.int32)

    fwd = jax.jit(neumf_forward)
    rating = fwd(user_indices, item_indices, fused)
    rating = jax.block_until_ready(rating)

    # Pure-JAX f32 reference (original, un-folded parameters).
    def ref(u, i, p):
        v = jnp.concatenate([jnp.take(p["embedding_user"], u, axis=0),
                             jnp.take(p["item_title"], i, axis=0),
                             jnp.take(p["item_content"], i, axis=0)], axis=-1)
        h = v @ p["w1"] + p["b1"]
        h = (h - p["mean1"]) / jnp.sqrt(p["var1"] + BN_EPS) * p["g1"] + p["beta1"]
        h = jnp.maximum(h, 0.0)
        h = h @ p["w2"] + p["b2"]
        h = (h - p["mean2"]) / jnp.sqrt(p["var2"] + BN_EPS) * p["g2"] + p["beta2"]
        h = jnp.maximum(h, 0.0)
        return jax.nn.sigmoid(h @ p["wo"] + p["bo"])

    expected = ref(user_indices, item_indices, params)
    assert rating.shape == (batch, 1)
    # bf16 weight/one-hot stream vs f32 reference -> loosened tolerance.
    assert jnp.allclose(rating, expected, atol=2e-2, rtol=2e-2), (
        jnp.max(jnp.abs(rating - expected)))
    print("KERNEL_OK")
</pallas_src>

<mosaic_0001>
module attributes {stable_mosaic.version = 11 : i64} {
  func.func @_neumf_kernel(%arg0: i32, %arg1: memref<1x128xi32, #tpu.memory_space<vmem>>, %arg2: memref<1x128xi32, #tpu.memory_space<vmem>>, %arg3: memref<32x32xbf16, #tpu.memory_space<vmem>>, %arg4: memref<32x40xbf16, #tpu.memory_space<vmem>>, %arg5: memref<32x1xf32, #tpu.memory_space<vmem>>, %arg6: memref<16x32xbf16, #tpu.memory_space<vmem>>, %arg7: memref<16x1xf32, #tpu.memory_space<vmem>>, %arg8: memref<16x1xf32, #tpu.memory_space<vmem>>, %arg9: memref<1x1xf32, #tpu.memory_space<smem>>, %arg10: memref<1x128xf32, #tpu.memory_space<vmem>>) attributes {dimension_semantics = [#tpu.dimension_semantics<parallel>], iteration_bounds = array<i64: 1>, scalar_prefetch = 0 : i64, scratch_operands = 0 : i64, tpu.core_type = #tpu.core_type<tc>, window_params = [{transform_indices = @transform_0, window_bounds = array<i64: 1, 128>}, {transform_indices = @transform_1, window_bounds = array<i64: 1, 128>}, {pipeline_mode = #tpu.pipeline_mode<synchronous>, transform_indices = @transform_2, window_bounds = array<i64: 32, 32>}, {pipeline_mode = #tpu.pipeline_mode<synchronous>, transform_indices = @transform_3, window_bounds = array<i64: 32, 40>}, {pipeline_mode = #tpu.pipeline_mode<synchronous>, transform_indices = @transform_4, window_bounds = array<i64: 32, 1>}, {pipeline_mode = #tpu.pipeline_mode<synchronous>, transform_indices = @transform_5, window_bounds = array<i64: 16, 32>}, {pipeline_mode = #tpu.pipeline_mode<synchronous>, transform_indices = @transform_6, window_bounds = array<i64: 16, 1>}, {pipeline_mode = #tpu.pipeline_mode<synchronous>, transform_indices = @transform_7, window_bounds = array<i64: 16, 1>}, {transform_indices = @transform_8, window_bounds = array<i64: 1, 1>}, {transform_indices = @transform_9, window_bounds = array<i64: 1, 128>}]} {
    %0 = tpu.iota {dimensions = array<i32: 0>} : vector<32x128xi32>
    %c0 = arith.constant 0 : index
    %c0_0 = arith.constant 0 : index
    %1 = vector.load %arg1[%c0, %c0_0] : memref<1x128xi32, #tpu.memory_space<vmem>>, vector<1x128xi32>
    %2 = vector.broadcast %1 : vector<1x128xi32> to vector<32x128xi32>
    %3 = arith.cmpi eq, %0, %2 : vector<32x128xi32>
    %4 = arith.extui %3 : vector<32x128xi1> to vector<32x128xi32>
    %5 = arith.sitofp %4 : vector<32x128xi32> to vector<32x128xf32>
    %6 = arith.truncf %5 : vector<32x128xf32> to vector<32x128xbf16>
    %7 = tpu.iota {dimensions = array<i32: 0>} : vector<40x128xi32>
    %c0_1 = arith.constant 0 : index
    %c0_2 = arith.constant 0 : index
    %8 = vector.load %arg2[%c0_1, %c0_2] : memref<1x128xi32, #tpu.memory_space<vmem>>, vector<1x128xi32>
    %9 = vector.broadcast %8 : vector<1x128xi32> to vector<40x128xi32>
    %10 = arith.cmpi eq, %7, %9 : vector<40x128xi32>
    %11 = arith.extui %10 : vector<40x128xi1> to vector<40x128xi32>
    %12 = arith.sitofp %11 : vector<40x128xi32> to vector<40x128xf32>
    %13 = arith.truncf %12 : vector<40x128xf32> to vector<40x128xbf16>
    %c0_3 = arith.constant 0 : index
    %c0_4 = arith.constant 0 : index
    %14 = vector.load %arg3[%c0_3, %c0_4] : memref<32x32xbf16, #tpu.memory_space<vmem>>, vector<32x32xbf16>
    %cst = arith.constant dense<0.000000e+00> : vector<32x128xf32>
    %15 = tpu.matmul %14, %6, %cst {dimension_numbers = #tpu.dot_dimension_numbers<[1], [0], [0], [1], [0, 0, 1, 1], [], []>} : vector<32x32xbf16>, vector<32x128xbf16>, vector<32x128xf32> -> vector<32x128xf32>
    %c0_5 = arith.constant 0 : index
    %c0_6 = arith.constant 0 : index
    %16 = vector.load %arg4[%c0_5, %c0_6] : memref<32x40xbf16, #tpu.memory_space<vmem>>, vector<32x40xbf16>
    %cst_7 = arith.constant dense<0.000000e+00> : vector<32x128xf32>
    %17 = tpu.matmul %16, %13, %cst_7 {dimension_numbers = #tpu.dot_dimension_numbers<[1], [0], [0], [1], [0, 0, 1, 1], [], []>} : vector<32x40xbf16>, vector<40x128xbf16>, vector<32x128xf32> -> vector<32x128xf32>
    %18 = arith.addf %15, %17 : vector<32x128xf32>
    %c0_8 = arith.constant 0 : index
    %c0_9 = arith.constant 0 : index
    %19 = vector.load %arg5[%c0_8, %c0_9] : memref<32x1xf32, #tpu.memory_space<vmem>>, vector<32x1xf32>
    %20 = vector.broadcast %19 : vector<32x1xf32> to vector<32x128xf32>
    %21 = arith.addf %18, %20 : vector<32x128xf32>
    %cst_10 = arith.constant 0.000000e+00 : f32
    %22 = vector.broadcast %cst_10 : f32 to vector<32x128xf32>
    %23 = arith.maximumf %21, %22 : vector<32x128xf32>
    %c0_11 = arith.constant 0 : index
    %c0_12 = arith.constant 0 : index
    %24 = vector.load %arg6[%c0_11, %c0_12] : memref<16x32xbf16, #tpu.memory_space<vmem>>, vector<16x32xbf16>
    %25 = arith.truncf %23 : vector<32x128xf32> to vector<32x128xbf16>
    %cst_13 = arith.constant dense<0.000000e+00> : vector<16x128xf32>
    %26 = tpu.matmul %24, %25, %cst_13 {dimension_numbers = #tpu.dot_dimension_numbers<[1], [0], [0], [1], [0, 0, 1, 1], [], []>} : vector<16x32xbf16>, vector<32x128xbf16>, vector<16x128xf32> -> vector<16x128xf32>
    %c0_14 = arith.constant 0 : index
    %c0_15 = arith.constant 0 : index
    %27 = vector.load %arg7[%c0_14, %c0_15] : memref<16x1xf32, #tpu.memory_space<vmem>>, vector<16x1xf32>
    %28 = vector.broadcast %27 : vector<16x1xf32> to vector<16x128xf32>
    %29 = arith.addf %26, %28 : vector<16x128xf32>
    %cst_16 = arith.constant 0.000000e+00 : f32
    %30 = vector.broadcast %cst_16 : f32 to vector<16x128xf32>
    %31 = arith.maximumf %29, %30 : vector<16x128xf32>
    %c0_17 = arith.constant 0 : index
    %c0_18 = arith.constant 0 : index
    %32 = vector.load %arg8[%c0_17, %c0_18] : memref<16x1xf32, #tpu.memory_space<vmem>>, vector<16x1xf32>
    %33 = vector.broadcast %32 : vector<16x1xf32> to vector<16x128xf32>
    %34 = arith.mulf %31, %33 : vector<16x128xf32>
    %cst_19 = arith.constant dense<0.000000e+00> : vector<128xf32>
    %35 = vector.multi_reduction <add>, %34, %cst_19 [0] : vector<16x128xf32> to vector<128xf32>
    %36 = vector.shape_cast %35 : vector<128xf32> to vector<1x128xf32>
    %c0_20 = arith.constant 0 : index
    %c0_21 = arith.constant 0 : index
    %37 = memref.load %arg9[%c0_20, %c0_21] : memref<1x1xf32, #tpu.memory_space<smem>>
    %38 = vector.broadcast %37 : f32 to vector<1x128xf32>
    %39 = arith.addf %36, %38 : vector<1x128xf32>
    %40 = arith.negf %39 : vector<1x128xf32>
    %41 = math.exp %40 : vector<1x128xf32>
    %cst_22 = arith.constant 1.000000e+00 : f32
    %42 = vector.broadcast %cst_22 : f32 to vector<1x128xf32>
    %43 = arith.addf %42, %41 : vector<1x128xf32>
    %44 = arith.divf %42, %43 : vector<1x128xf32>
    %c0_23 = arith.constant 0 : index
    %c0_24 = arith.constant 0 : index
    %45 = vector.load %arg10[%c0_23, %c0_24] : memref<1x128xf32, #tpu.memory_space<vmem>>, vector<1x128xf32>
    tpu.vector_store %arg10[%c0_23, %c0_24], %44 {strides = array<i32>} : memref<1x128xf32, #tpu.memory_space<vmem>>, vector<1x128xf32>,
    return
  }
  func.func @transform_0(%arg0: i32) -> (i32, i32) {
    %c0_i32 = arith.constant 0 : i32
    %c0_i32_0 = arith.constant 0 : i32
    return %arg0, %c0_i32 : i32, i32
  }
  func.func @transform_1(%arg0: i32) -> (i32, i32) {
    %c0_i32 = arith.constant 0 : i32
    %c0_i32_0 = arith.constant 0 : i32
    return %arg0, %c0_i32 : i32, i32
  }
  func.func @transform_2(%arg0: i32) -> (i32, i32) {
    %c0_i32 = arith.constant 0 : i32
    %c0_i32_0 = arith.constant 0 : i32
    %c0_i32_1 = arith.constant 0 : i32
    return %c0_i32, %c0_i32_0 : i32, i32
  }
  func.func @transform_3(%arg0: i32) -> (i32, i32) {
    %c0_i32 = arith.constant 0 : i32
    %c0_i32_0 = arith.constant 0 : i32
    %c0_i32_1 = arith.constant 0 : i32
    return %c0_i32, %c0_i32_0 : i32, i32
  }
  func.func @transform_4(%arg0: i32) -> (i32, i32) {
    %c0_i32 = arith.constant 0 : i32
    %c0_i32_0 = arith.constant 0 : i32
    %c0_i32_1 = arith.constant 0 : i32
    return %c0_i32, %c0_i32_0 : i32, i32
  }
  func.func @transform_5(%arg0: i32) -> (i32, i32) {
    %c0_i32 = arith.constant 0 : i32
    %c0_i32_0 = arith.constant 0 : i32
    %c0_i32_1 = arith.constant 0 : i32
    return %c0_i32, %c0_i32_0 : i32, i32
  }
  func.func @transform_6(%arg0: i32) -> (i32, i32) {
    %c0_i32 = arith.constant 0 : i32
    %c0_i32_0 = arith.constant 0 : i32
    %c0_i32_1 = arith.constant 0 : i32
    return %c0_i32, %c0_i32_0 : i32, i32
  }
  func.func @transform_7(%arg0: i32) -> (i32, i32) {
    %c0_i32 = arith.constant 0 : i32
    %c0_i32_0 = arith.constant 0 : i32
    %c0_i32_1 = arith.constant 0 : i32
    return %c0_i32, %c0_i32_0 : i32, i32
  }
  func.func @transform_8(%arg0: i32) -> (i32, i32) {
    %c0_i32 = arith.constant 0 : i32
    %c0_i32_0 = arith.constant 0 : i32
    %c0_i32_1 = arith.constant 0 : i32
    return %c0_i32, %c0_i32_0 : i32, i32
  }
  func.func @transform_9(%arg0: i32) -> (i32, i32) {
    %c0_i32 = arith.constant 0 : i32
    %c0_i32_0 = arith.constant 0 : i32
    return %arg0, %c0_i32 : i32, i32
  }
}

</mosaic_0001>

<llo_original>
// kernel: neumf_forward.1
$region0: #{neumf_forward.1}
  #allocation0 [shape = 'u32[]', space=smem, size = 0x4, offset = 0x4, fixed_abs, tag = 'smem constant byte address 0x4 - core index']
  #allocation1 [shape = 'u32[144,128]{1,0:T(1,128)}', space=vmem, size = 0x12000, scoped, tag = 'internal scratch']
  #allocation2 [shape = 'f32[1,1]{1,0:T(1,128)S(6)}', space=smem, size = 0x200, scoped, tag = 'scoped memory for neumf_forward.1']
  %s0 = inlined_call_operand.vmem [shape: s32[1,128], index: 0, kind: input, shape index: {}]
  %s1 = inlined_call_operand.vmem [shape: s32[1,128], index: 1, kind: input, shape index: {}]
  %s2 = inlined_call_operand.vmem [shape: bf16[32,32], index: 2, kind: input, shape index: {}]
  %s3 = inlined_call_operand.vmem [shape: bf16[32,40], index: 3, kind: input, shape index: {}]
  %s4 = inlined_call_operand.vmem [shape: f32[32,1], index: 4, kind: input, shape index: {}]
  %s5 = inlined_call_operand.vmem [shape: bf16[16,32], index: 5, kind: input, shape index: {}]
  %s6 = inlined_call_operand.vmem [shape: f32[16,1], index: 6, kind: input, shape index: {}]
  %s7 = inlined_call_operand.vmem [shape: f32[16,1], index: 7, kind: input, shape index: {}]
  %s8 = inlined_call_operand.<no memory space> [shape: f32[1,1], index: 8, kind: input, shape index: {}]
  %s9 = inlined_call_operand.vmem [shape: f32[1,128], index: 9, kind: output, shape index: {}]
  %s10 = sld [smem:[#allocation0]]
  $region46: #{neumf_forward.1} parent=0
    _
  %s12 = ssub.s32 1, %s10
  %s13 = scalar_select 0, %s12, %s10
  %14 = sst [smem:[#allocation2]] %s8
  // Predicated region
  $region2: #{neumf_forward.1} parent=0 // pred_check
    _
  $region3: #{neumf_forward.1} parent=0 // pred_check_branch
    %16 = sbr.rel (0) target = $region5
  $region4: #{neumf_forward.1} parent=0 // pred_region
    _
  $region5: #{neumf_forward.1} parent=0 // pred_fallthru
    _
  // Predicated region
  $region6: #{neumf_forward.1} parent=0 // pred_check
    _
  $region7: #{neumf_forward.1} parent=0 // pred_check_branch
    %18 = sbr.rel (0) target = $region9
  $region8: #{neumf_forward.1} parent=0 // pred_region
    _
  $region9: #{neumf_forward.1} parent=0 // pred_fallthru
    _
  // Predicated region
  $region10: #{neumf_forward.1} parent=0 // pred_check
    _
  $region11: #{neumf_forward.1} parent=0 // pred_check_branch
    %20 = sbr.rel (0) target = $region13
  $region12: #{neumf_forward.1} parent=0 // pred_region
    _
  $region13: #{neumf_forward.1} parent=0 // pred_fallthru
    _
  // Predicated region
  $region14: #{neumf_forward.1} parent=0 // pred_check
    _
  $region15: #{neumf_forward.1} parent=0 // pred_check_branch
    %22 = sbr.rel (0) target = $region17
  $region16: #{neumf_forward.1} parent=0 // pred_region
    _
  $region17: #{neumf_forward.1} parent=0 // pred_fallthru
    _
  // Predicated region
  $region18: #{neumf_forward.1} parent=0 // pred_check
    _
  $region19: #{neumf_forward.1} parent=0 // pred_check_branch
    %24 = sbr.rel (0) target = $region21
  $region20: #{neumf_forward.1} parent=0 // pred_region
    _
  $region21: #{neumf_forward.1} parent=0 // pred_fallthru
    _
  // Predicated region
  $region22: #{neumf_forward.1} parent=0 // pred_check
    _
  $region23: #{neumf_forward.1} parent=0 // pred_check_branch
    %26 = sbr.rel (0) target = $region25
  $region24: #{neumf_forward.1} parent=0 // pred_region
    _
  $region25: #{neumf_forward.1} parent=0 // pred_fallthru
    _
  // Predicated region
  $region26: #{neumf_forward.1} parent=0 // pred_check
    _
  $region27: #{neumf_forward.1} parent=0 // pred_check_branch
    %28 = sbr.rel (0) target = $region29
  $region28: #{neumf_forward.1} parent=0 // pred_region
    _
  $region29: #{neumf_forward.1} parent=0 // pred_fallthru
    _
  // Predicated region
  $region30: #{neumf_forward.1} parent=0 // pred_check
    _
  $region31: #{neumf_forward.1} parent=0 // pred_check_branch
    %30 = sbr.rel (0) target = $region33
  $region32: #{neumf_forward.1} parent=0 // pred_region
    _
  $region33: #{neumf_forward.1} parent=0 // pred_fallthru
    _
  // Predicated region
  $region34: #{neumf_forward.1} parent=0 // pred_check
    _
  $region35: #{neumf_forward.1} parent=0 // pred_check_branch
    %32 = sbr.rel (0) target = $region37
  $region36: #{neumf_forward.1} parent=0 // pred_region
    _
  $region37: #{neumf_forward.1} parent=0 // pred_fallthru
    _
  %v34 = vlaneseq
  %v35 = vshrl.u32 %v34, 7
  %v36 = vadd.s32 %v35, 8
  %v37 = vadd.s32 %v35, 16
  %v38 = vadd.s32 %v35, 24
  %v39 = vld [vmem:[%s0] sm:$0x1]
  %v40 = vlaneseq
  %v41 = vshrl.u32 %v40, 7
  %v42 = vsub.s32 0, %v41
  %v43 = vrot.slane %v39, %v42
  %vm44 = vcmp.eq.s32.totalorder %v35, %v43
  %vm45 = vcmp.eq.s32.totalorder %v36, %v43
  %vm46 = vcmp.eq.s32.totalorder %v37, %v43
  %vm47 = vcmp.eq.s32.totalorder %v38, %v43
  %v48 = vsel %vm44, 1, 0
  %v49 = vsel %vm45, 1, 0
  %v50 = vsel %vm46, 1, 0
  %v51 = vsel %vm47, 1, 0
  %v52 = vcvt.s32.f32 %v48
  %v53 = vcvt.s32.f32 %v49
  %v54 = vcvt.s32.f32 %v50
  %v55 = vcvt.s32.f32 %v51
  %v56 = vpack.c.bf16 %v53, %v52
  %v57 = vpack.c.bf16 %v55, %v54
  %v58 = vadd.s32 %v35, 32
  %v59 = vld [vmem:[%s1] sm:$0x1]
  %v60 = vlaneseq
  %v61 = vshrl.u32 %v60, 7
  %v62 = vsub.s32 0, %v61
  %v63 = vrot.slane %v59, %v62
  %vm64 = vcmp.eq.s32.totalorder %v35, %v63
  %vm65 = vcmp.eq.s32.totalorder %v36, %v63
  %vm66 = vcmp.eq.s32.totalorder %v37, %v63
  %vm67 = vcmp.eq.s32.totalorder %v38, %v63
  %vm68 = vcmp.eq.s32.totalorder %v58, %v63
  %v69 = vsel %vm64, 1, 0
  %v70 = vsel %vm65, 1, 0
  %v71 = vsel %vm66, 1, 0
  %v72 = vsel %vm67, 1, 0
  %v73 = vsel %vm68, 1, 0
  %v74 = vcvt.s32.f32 %v69
  %v75 = vcvt.s32.f32 %v70
  %v76 = vcvt.s32.f32 %v71
  %v77 = vcvt.s32.f32 %v72
  %v78 = vcvt.s32.f32 %v73
  %v79 = vpack.c.bf16 %v75, %v74
  %v80 = vpack.c.bf16 %v77, %v76
  %v81 = vpack.c.bf16 %v78, %v78
  %v82 = vld [vmem:[%s2] sm:$0xf]
  %v83 = vld [vmem:[%s2 + $0x4] sm:$0xf]
  %v84 = vld [vmem:[%s2 + $0x8] sm:$0xf]
  %v85 = vld [vmem:[%s2 + $0xc] sm:$0xf]
  %v86 = vld [vmem:[%s3] sm:$0xf]
  %v87 = vld [vmem:[%s3 + $0x4] sm:$0xf]
  %v88 = vld [vmem:[%s3 + $0x8] sm:$0xf]
  %v89 = vld [vmem:[%s3 + $0xc] sm:$0xf]
  %v94 = vunpack.c.l.b16 %v86
  %v95 = vunpack.c.l.b16 %v87
  %v96 = vunpack.c.l.b16 %v88
  %v97 = vunpack.c.l.b16 %v89
  %v98 = vpack.c.b16 %v95, %v94
  %v99 = vpack.c.b16 %v97, %v96
  %vm100 = vcmask 326656
  %v102 = vsel %vm100, %v98, 0
  %v105 = vsel %vm100, %v99, 0
  %vm107 = vcmask 1043456
  %v109 = vsel %vm107, %v81, 0
  %111 = vmatprep.subr.bf16.mxu0 0
  %112 = vmatpush1.bf16.msra.mxu0 0
  %113 = vmatprep.subr.bf16.mxu0 0
  %114 = vmatpush1.bf16.msra.mxu0 0
  %115 = vmatprep.subr.bf16.mxu0 0
  %116 = vmatpush1.bf16.msra.mxu0 0
  %117 = vmatprep.subr.bf16.mxu0 0
  %118 = vmatpush1.bf16.msra.mxu0 0
  %119 = vmatprep.subr.bf16.mxu0 0
  %120 = vmatpush1.bf16.msra.mxu0 0
  %121 = vmatprep.subr.bf16.mxu0 0
  %122 = vmatpush1.bf16.msra.mxu0 %v109
  %123 = vmatprep.subr.bf16.mxu0 0
  %124 = vmatpush1.bf16.msra.mxu0 %v80
  %125 = vmatprep.subr.bf16.mxu0 0
  %126 = vmatpush1.bf16.msra.mxu0 %v79
  %127 = vmatprep.subr.bf16.mxu0 0
  %128 = vmatpush2.bf16.msra.mxu0 0
  %129 = vmatprep.subr.bf16.mxu0 0
  %130 = vmatpush2.bf16.msra.mxu0 0
  %131 = vmatprep.subr.bf16.mxu0 0
  %132 = vmatpush2.bf16.msra.mxu0 0
  %133 = vmatprep.subr.bf16.mxu0 0
  %134 = vmatpush2.bf16.msra.mxu0 0
  %135 = vmatprep.subr.bf16.mxu0 0
  %136 = vmatpush2.bf16.msra.mxu0 0
  %137 = vmatprep.subr.bf16.mxu0 0
  %138 = vmatpush2.bf16.msra.mxu0 0
  %139 = vmatprep.subr.bf16.mxu0 0
  %140 = vmatpush2.bf16.msra.mxu0 0
  %141 = vmatprep.subr.bf16.mxu0 0
  %142 = vmatpush2.bf16.msra.mxu0 0
  %143 = vmatprep.mubr.bf16.mxu0 0
  %144 = vmatmul.mubr.bf16.gmra.mxu0 %v102
  %v145 = vpop.f32.mrf.mxu0
  %v146 = vadd.f32 0.0, %v145
  %v147 = vpop.f32.mrf.mxu0
  %v148 = vpop.f32.mrf.mxu0
  %v149 = vadd.f32 0.0, %v148
  %v150 = vpop.f32.mrf.mxu0
  %151 = vmatprep.mubr.bf16.mxu0 0
  %152 = vmatmul.mubr.bf16.gmra.mxu0 %v105
  %v153 = vpop.f32.mrf.mxu0
  %v154 = vadd.f32 0.0, %v153
  %v155 = vpop.f32.mrf.mxu0
  %v156 = vpop.f32.mrf.mxu0
  %v157 = vadd.f32 0.0, %v156
  %v158 = vpop.f32.mrf.mxu0
  %159 = vdwg.mxu0
  %v164 = vunpack.c.l.b16 %v82
  %v165 = vunpack.c.l.b16 %v83
  %v166 = vunpack.c.l.b16 %v84
  %v167 = vunpack.c.l.b16 %v85
  %v168 = vpack.c.b16 %v165, %v164
  %v169 = vpack.c.b16 %v167, %v166
  %vm170 = vcmask 261120
  %v172 = vsel %vm170, %v168, 0
  %v175 = vsel %vm170, %v169, 0
  %177 = vmatprep.subr.bf16.mxu0 0
  %178 = vmatpush1.bf16.msra.mxu0 0
  %179 = vmatprep.subr.bf16.mxu0 0
  %180 = vmatpush1.bf16.msra.mxu0 0
  %181 = vmatprep.subr.bf16.mxu0 0
  %182 = vmatpush1.bf16.msra.mxu0 0
  %183 = vmatprep.subr.bf16.mxu0 0
  %184 = vmatpush1.bf16.msra.mxu0 0
  %185 = vmatprep.subr.bf16.mxu0 0
  %186 = vmatpush1.bf16.msra.mxu0 0
  %187 = vmatprep.subr.bf16.mxu0 0
  %188 = vmatpush1.bf16.msra.mxu0 0
  %189 = vmatprep.subr.bf16.mxu0 0
  %190 = vmatpush1.bf16.msra.mxu0 %v57
  %191 = vmatprep.subr.bf16.mxu0 0
  %192 = vmatpush1.bf16.msra.mxu0 %v56
  %193 = vmatprep.subr.bf16.mxu0 0
  %194 = vmatpush2.bf16.msra.mxu0 0
  %195 = vmatprep.subr.bf16.mxu0 0
  %196 = vmatpush2.bf16.msra.mxu0 0
  %197 = vmatprep.subr.bf16.mxu0 0
  %198 = vmatpush2.bf16.msra.mxu0 0
  %199 = vmatprep.subr.bf16.mxu0 0
  %200 = vmatpush2.bf16.msra.mxu0 0
  %201 = vmatprep.subr.bf16.mxu0 0
  %202 = vmatpush2.bf16.msra.mxu0 0
  %203 = vmatprep.subr.bf16.mxu0 0
  %204 = vmatpush2.bf16.msra.mxu0 0
  %205 = vmatprep.subr.bf16.mxu0 0
  %206 = vmatpush2.bf16.msra.mxu0 0
  %207 = vmatprep.subr.bf16.mxu0 0
  %208 = vmatpush2.bf16.msra.mxu0 0
  %209 = vmatprep.mubr.bf16.mxu0 0
  %210 = vmatmul.mubr.bf16.gmra.mxu0 %v172
  %v211 = vpop.f32.mrf.mxu0
  %v212 = vadd.f32 %v146, %v211
  %v213 = vpop.f32.mrf.mxu0
  %v214 = vpop.f32.mrf.mxu0
  %v215 = vadd.f32 %v149, %v214
  %v216 = vpop.f32.mrf.mxu0
  %217 = vmatprep.mubr.bf16.mxu0 0
  %218 = vmatmul.mubr.bf16.gmra.mxu0 %v175
  %v219 = vpop.f32.mrf.mxu0
  %v220 = vadd.f32 %v154, %v219
  %v221 = vpop.f32.mrf.mxu0
  %v222 = vpop.f32.mrf.mxu0
  %v223 = vadd.f32 %v157, %v222
  %v224 = vpop.f32.mrf.mxu0
  %225 = vdwg.mxu0
  %v226 = vld [vmem:[%s4] sm:$0xff]
  %v227 = vld [vmem:[%s4 + $0x8] sm:$0xff]
  %v228 = vld [vmem:[%s4 + $0x10] sm:$0xff]
  %v229 = vld [vmem:[%s4 + $0x18] sm:$0xff]
  %231 = vset.pattern.permute.xlu0 0
  %232 = vperm.xlu0 %231, %v226
  %v233 = vpop.permute.xlu0 %232
  %236 = vset.pattern.permute.xlu0 0
  %237 = vperm.xlu0 %236, %v227
  %v238 = vpop.permute.xlu0 %237
  %241 = vset.pattern.permute.xlu0 0
  %242 = vperm.xlu0 %241, %v228
  %v243 = vpop.permute.xlu0 %242
  %246 = vset.pattern.permute.xlu0 0
  %247 = vperm.xlu0 %246, %v229
  %v248 = vpop.permute.xlu0 %247
  %v250 = vadd.f32 %v212, %v233
  %v251 = vadd.f32 %v215, %v238
  %v252 = vadd.f32 %v220, %v243
  %v253 = vadd.f32 %v223, %v248
  %v254 = vmax.f32 %v250, 0.0
  %v255 = vmax.f32 %v251, 0.0
  %v256 = vmax.f32 %v252, 0.0
  %v257 = vmax.f32 %v253, 0.0
  %v258 = vld [vmem:[%s5] sm:$0xf]
  %v259 = vld [vmem:[%s5 + $0x4] sm:$0xf]
  %v260 = vpack.c.bf16 %v255, %v254
  %v261 = vpack.c.bf16 %v257, %v256
  %v262 = vld [vmem:[%s6] sm:$0xff]
  %v263 = vld [vmem:[%s6 + $0x8] sm:$0xff]
  %265 = vset.pattern.permute.xlu0 0
  %266 = vperm.xlu0 %265, %v262
  %v267 = vpop.permute.xlu0 %266
  %270 = vset.pattern.permute.xlu0 0
  %271 = vperm.xlu0 %270, %v263
  %v272 = vpop.permute.xlu0 %271
  %v276 = vunpack.c.l.b16 %v258
  %v277 = vunpack.c.l.b16 %v259
  %v278 = vpack.c.b16 %v277, %v276
  %v280 = vsel %vm170, %v278, 0
  %282 = vmatprep.subr.bf16.mxu0 0
  %283 = vmatpush1.bf16.msra.mxu0 0
  %284 = vmatprep.subr.bf16.mxu0 0
  %285 = vmatpush1.bf16.msra.mxu0 0
  %286 = vmatprep.subr.bf16.mxu0 0
  %287 = vmatpush1.bf16.msra.mxu0 0
  %288 = vmatprep.subr.bf16.mxu0 0
  %289 = vmatpush1.bf16.msra.mxu0 0
  %290 = vmatprep.subr.bf16.mxu0 0
  %291 = vmatpush1.bf16.msra.mxu0 0
  %292 = vmatprep.subr.bf16.mxu0 0
  %293 = vmatpush1.bf16.msra.mxu0 0
  %294 = vmatprep.subr.bf16.mxu0 0
  %295 = vmatpush1.bf16.msra.mxu0 %v261
  %296 = vmatprep.subr.bf16.mxu0 0
  %297 = vmatpush1.bf16.msra.mxu0 %v260
  %298 = vmatprep.subr.bf16.mxu0 0
  %299 = vmatpush2.bf16.msra.mxu0 0
  %300 = vmatprep.subr.bf16.mxu0 0
  %301 = vmatpush2.bf16.msra.mxu0 0
  %302 = vmatprep.subr.bf16.mxu0 0
  %303 = vmatpush2.bf16.msra.mxu0 0
  %304 = vmatprep.subr.bf16.mxu0 0
  %305 = vmatpush2.bf16.msra.mxu0 0
  %306 = vmatprep.subr.bf16.mxu0 0
  %307 = vmatpush2.bf16.msra.mxu0 0
  %308 = vmatprep.subr.bf16.mxu0 0
  %309 = vmatpush2.bf16.msra.mxu0 0
  %310 = vmatprep.subr.bf16.mxu0 0
  %311 = vmatpush2.bf16.msra.mxu0 0
  %312 = vmatprep.subr.bf16.mxu0 0
  %313 = vmatpush2.bf16.msra.mxu0 0
  %314 = vmatprep.mubr.bf16.mxu0 0
  %315 = vmatmul.mubr.bf16.gmra.mxu0 %v280
  %v316 = vpop.f32.mrf.mxu0
  %v317 = vadd.f32 %v267, %v316
  %v318 = vpop.f32.mrf.mxu0
  %v319 = vpop.f32.mrf.mxu0
  %v320 = vadd.f32 %v272, %v319
  %v321 = vpop.f32.mrf.mxu0
  %322 = vdwg.mxu0
  %v323 = vmax.f32 %v317, 0.0
  %v324 = vmax.f32 %v320, 0.0
  %v325 = vld [vmem:[%s7] sm:$0xff]
  %v326 = vld [vmem:[%s7 + $0x8] sm:$0xff]
  %328 = vset.pattern.permute.xlu0 0
  %329 = vperm.xlu0 %328, %v325
  %v330 = vpop.permute.xlu0 %329
  %333 = vset.pattern.permute.xlu0 0
  %334 = vperm.xlu0 %333, %v326
  %v335 = vpop.permute.xlu0 %334
  %v337 = vmul.f32 %v323, %v330
  %v338 = vmul.f32 %v324, %v335
  %v339 = vadd.f32 %v337, %v338
  %v340 = vrot.slane %v339, 4
  %v341 = vadd.f32 %v339, %v340
  %v342 = vrot.slane %v341, 2
  %v343 = vadd.f32 %v341, %v342
  %v344 = vrot.slane %v343, 1
  %v345 = vadd.f32 %v343, %v344
  %s346 = sld [smem:[#allocation2]]
  %v347 = vstv %s346
  %v348 = vadd.f32 %v345, %v347
  %v349 = vxor.u32 %v348, 2147483648
  %v350 = vmul.f32 %v349, 1.442695
  %v351 = vpow.pop %v350
  %v352 = vadd.f32 %v351, 1.0
  %v353 = vrcp.pop %v352
  %v354 = vmul.f32 1.0, %v353
  %355 = vst [vmem:[%s9] sm:$0x1] %v354
  // Predicated region
  $region38: #{neumf_forward.1} parent=0 // pred_check
    _
  $region39: #{neumf_forward.1} parent=0 // pred_check_branch
    %357 = sbr.rel (0) target = $region41
  $region40: #{neumf_forward.1} parent=0 // pred_region
    _
  $region41: #{neumf_forward.1} parent=0 // pred_fallthru
    _
  // Predicated region
  $region42: #{neumf_forward.1} parent=0 // pred_check
    _
  $region43: #{neumf_forward.1} parent=0 // pred_check_branch
    %359 = sbr.rel (0) target = $region45
  $region44: #{neumf_forward.1} parent=0 // pred_region
    _
  $region45: #{neumf_forward.1} parent=0 // pred_fallthru
    _

</llo_original>
